<compile_context>
chip_gen: v7x
topology: tpu7x:2x2x1
jax: 0.10.0
libtpu: 0.0.40
codegen_flags: <defaults>
</compile_context>

<pallas_src>
import jax
import jax.numpy as jnp
from jax.experimental import pallas as pl
from jax.experimental.pallas import tpu as pltpu


def _sublane_granule(dtype):
    """Minimum second-to-last-dim tile for packed layouts."""
    return {4: 8, 2: 16, 1: 32}.get(jnp.dtype(dtype).itemsize, 8)


def _largest_divisor_block(dim, granule, target):
    """Largest divisor of `dim` that is a multiple of `granule` and <= target.

    Falls back to the full dim (always legal for BlockSpec) if none exists.
    """
    best = 0
    d = granule
    cap = min(dim, target)
    while d <= cap:
        if dim % d == 0:
            best = d
        d += granule
    return best if best > 0 else dim


def _antidiag(n, dtype):
    """n x n anti-diagonal 0/1 matrix: (A @ x) reverses rows, (x @ A) lanes."""
    r = jax.lax.broadcasted_iota(jnp.int32, (n, n), 0)
    c = jax.lax.broadcasted_iota(jnp.int32, (n, n), 1)
    return (r + c == n - 1).astype(dtype)


def _make_flip_kernel(hblk, wblk, dtype):
    def _flip_kernel(flags_ref, x_ref, o_ref):
        """flags_ref: SMEM int32[2] = [flip_w, flip_h] (scalar-prefetched).

        x_ref : VMEM dtype[1, HBLK, WBLK] input block.  When a flip fires, the
                *block order* along that axis was already reversed by the
                index_map; only elements inside the block remain to reverse.
        o_ref : VMEM dtype[1, HBLK, WBLK] output block (written exactly once).
        """
        flip_w = flags_ref[0] > 0
        flip_h = flags_ref[1] > 0
        not_w = jnp.logical_not(flip_w)
        not_h = jnp.logical_not(flip_h)

        @pl.when(jnp.logical_and(not_w, not_h))
        def _():
            o_ref[0] = x_ref[0]

        @pl.when(jnp.logical_and(flip_h, not_w))
        def _():
            ph = _antidiag(hblk, dtype)
            o_ref[0] = jnp.dot(
                ph, x_ref[0], preferred_element_type=jnp.float32
            ).astype(o_ref.dtype)

        @pl.when(jnp.logical_and(flip_w, not_h))
        def _():
            pw = _antidiag(wblk, dtype)
            o_ref[0] = jnp.dot(
                x_ref[0], pw, preferred_element_type=jnp.float32
            ).astype(o_ref.dtype)

        @pl.when(jnp.logical_and(flip_w, flip_h))
        def _():
            ph = _antidiag(hblk, dtype)
            pw = _antidiag(wblk, dtype)
            # 0/1 permutation matmuls are exact; intermediate cast is lossless.
            hrev = jnp.dot(
                ph, x_ref[0], preferred_element_type=jnp.float32
            ).astype(dtype)
            o_ref[0] = jnp.dot(
                hrev, pw, preferred_element_type=jnp.float32
            ).astype(o_ref.dtype)

    return _flip_kernel


def tensor_only_transforms_pallas(x, flags, *, target_rows=512, target_cols=512):
    """x: dtype[C, H, W]; flags: int32[2] = [flip_w, flip_h]."""
    C, H, W = x.shape
    hblk = _largest_divisor_block(H, _sublane_granule(x.dtype), target_rows)
    wblk = _largest_divisor_block(W, 128, target_cols)
    nhb = H // hblk
    nwb = W // wblk

    def x_map(c, hb, wb, flags_ref):
        # Coarse axis reversal through DMA addressing: when a flip fires,
        # fetch the mirrored block index.  Flags are 0/1, so plain int math.
        fw = flags_ref[0]
        fh = flags_ref[1]
        return (c,
                hb + fh * (nhb - 1 - 2 * hb),
                wb + fw * (nwb - 1 - 2 * wb))

    def o_map(c, hb, wb, flags_ref):
        return (c, hb, wb)

    # VMEM budget from footprint: 2 double-buffered slabs (input + output),
    # in-kernel permutation tiles + matmul temporaries, plus fixed headroom.
    # Capped at 48 MiB to fit within v7x's 64 MiB physical VMEM.
    itemsize = jnp.dtype(x.dtype).itemsize
    block_bytes = hblk * wblk * itemsize
    vmem_bytes = (4 * block_bytes
                  + 4 * (hblk * hblk + wblk * wblk) * itemsize
                  + (8 << 20))
    vmem_limit = int(min(max(vmem_bytes, 16 << 20), 48 << 20))

    grid_spec = pltpu.PrefetchScalarGridSpec(
        num_scalar_prefetch=1,
        grid=(C, nhb, nwb),
        in_specs=[pl.BlockSpec((1, hblk, wblk), x_map)],
        out_specs=pl.BlockSpec((1, hblk, wblk), o_map),
    )

    return pl.pallas_call(
        _make_flip_kernel(hblk, wblk, x.dtype),
        out_shape=jax.ShapeDtypeStruct((C, H, W), x.dtype),
        grid_spec=grid_spec,
        compiler_params=pltpu.CompilerParams(
            dimension_semantics=("parallel", "parallel", "parallel"),
            vmem_limit_bytes=vmem_limit,
        ),
    )(flags, x)


def tensor_only_transforms(x, key, train=True):
    """JAX equivalent of TensorOnlyTransforms.forward."""
    if not train:
        # eval mode: identity passthrough (Python-level, like the module)
        return x, jnp.zeros((2,), jnp.int32)
    kw, kh = jax.random.split(key)
    flip_w = (jax.random.uniform(kw, ()) < 0.5).astype(jnp.int32)
    flip_h = (jax.random.uniform(kh, ()) < 0.5).astype(jnp.int32)
    flags = jnp.stack([flip_w, flip_h])
    # 25% of calls flip nothing: skip the kernel (and ~2x HBM traffic) entirely.
    out = jax.lax.cond(
        (flip_w + flip_h) > 0,
        lambda t: tensor_only_transforms_pallas(t, flags),
        lambda t: t,
        x,
    )
    return out, flags


def _reference(x, flags):
    ref = x
    if bool(flags[0]):
        ref = jnp.flip(ref, axis=2)   # torch.flip(dims=[2]) == W flip
    if bool(flags[1]):
        ref = jnp.flip(ref, axis=1)   # torch.flip(dims=[1]) == H flip
    return ref


if __name__ == "__main__":
    key = jax.random.PRNGKey(0)
    kx, kx2, kf = jax.random.split(key, 3)

    # Small module-consistent shape; single block per (C) slice.
    C, H, W = 4, 16, 16
    x = jax.random.normal(kx, (C, H, W), dtype=jnp.float32)

    # Deterministically exercise all four flip combinations.
    for fw in (0, 1):
        for fh in (0, 1):
            flags = jnp.array([fw, fh], dtype=jnp.int32)
            out = jax.block_until_ready(tensor_only_transforms_pallas(x, flags))
            ref = _reference(x, flags)
            assert out.shape == x.shape and out.dtype == x.dtype
            assert jnp.array_equal(out, ref), f"mismatch for flags=({fw},{fh})"

    # Multi-block shape with forced small tiles to exercise the coarse
    # block-index reversal along both H and W.
    x2 = jax.random.normal(kx2, (3, 32, 256), dtype=jnp.float32)
    for fw in (0, 1):
        for fh in (0, 1):
            flags = jnp.array([fw, fh], dtype=jnp.int32)
            out = jax.block_until_ready(
                tensor_only_transforms_pallas(x2, flags,
                                              target_rows=8, target_cols=128))
            ref = _reference(x2, flags)
            assert jnp.array_equal(out, ref), f"multi-block mismatch ({fw},{fh})"

    # Module-equivalent randomized path (torch.rand(1) < 0.5, twice).
    out, flags = tensor_only_transforms(x, kf, train=True)
    out = jax.block_until_ready(out)
    assert jnp.array_equal(out, _reference(x, flags))

    # Eval mode: identity passthrough.
    out_eval, _ = tensor_only_transforms(x, kf, train=False)
    assert jnp.array_equal(out_eval, x)

    print("KERNEL_OK")
</pallas_src>

<mosaic_0001>
module attributes {stable_mosaic.version = 11 : i64} {
  func.func @_flip_kernel(%arg0: i32, %arg1: i32, %arg2: i32, %arg3: memref<2xi32, #tpu.memory_space<smem>>, %arg4: memref<1x16x16xf32, #tpu.memory_space<vmem>>, %arg5: memref<1x16x16xf32, #tpu.memory_space<vmem>>) attributes {dimension_semantics = [#tpu.dimension_semantics<parallel>, #tpu.dimension_semantics<parallel>, #tpu.dimension_semantics<parallel>], iteration_bounds = array<i64: 4, 1, 1>, scalar_prefetch = 1 : i64, scratch_operands = 0 : i64, tpu.core_type = #tpu.core_type<tc>, window_params = [{transform_indices = @transform_0, window_bounds = array<i64: 1, 16, 16>}, {transform_indices = @transform_1, window_bounds = array<i64: 1, 16, 16>}]} {
    %c0 = arith.constant 0 : index
    %0 = memref.load %arg3[%c0] : memref<2xi32, #tpu.memory_space<smem>>
    %c0_i32 = arith.constant 0 : i32
    %1 = arith.cmpi sgt, %0, %c0_i32 : i32
    %c1 = arith.constant 1 : index
    %2 = memref.load %arg3[%c1] : memref<2xi32, #tpu.memory_space<smem>>
    %c0_i32_0 = arith.constant 0 : i32
    %3 = arith.cmpi sgt, %2, %c0_i32_0 : i32
    %true = arith.constant true
    %4 = arith.xori %1, %true : i1
    %true_1 = arith.constant true
    %5 = arith.xori %3, %true_1 : i1
    %6 = arith.andi %4, %5 : i1
    %7 = arith.extui %6 : i1 to i32
    %c0_i32_2 = arith.constant 0 : i32
    %8 = arith.cmpi ne, %7, %c0_i32_2 : i32
    scf.if %8 {
      %c0_6 = arith.constant 0 : index
      %c0_7 = arith.constant 0 : index
      %c0_8 = arith.constant 0 : index
      %18 = vector.load %arg4[%c0_6, %c0_7, %c0_8] : memref<1x16x16xf32, #tpu.memory_space<vmem>>, vector<1x16x16xf32>
      %19 = vector.shape_cast %18 : vector<1x16x16xf32> to vector<16x16xf32>
      %c0_9 = arith.constant 0 : index
      %c0_10 = arith.constant 0 : index
      %c0_11 = arith.constant 0 : index
      %20 = vector.load %arg5[%c0_9, %c0_10, %c0_11] : memref<1x16x16xf32, #tpu.memory_space<vmem>>, vector<1x16x16xf32>
      %21 = vector.shape_cast %20 : vector<1x16x16xf32> to vector<16x16xf32>
      %22 = vector.shape_cast %19 : vector<16x16xf32> to vector<1x16x16xf32>
      tpu.vector_store %arg5[%c0_9, %c0_10, %c0_11], %22 {strides = array<i32>} : memref<1x16x16xf32, #tpu.memory_space<vmem>>, vector<1x16x16xf32>,
    } else {
    }
    %9 = arith.andi %3, %4 : i1
    %10 = arith.extui %9 : i1 to i32
    %c0_i32_3 = arith.constant 0 : i32
    %11 = arith.cmpi ne, %10, %c0_i32_3 : i32
    scf.if %11 {
      %18 = tpu.iota {dimensions = array<i32: 0>} : vector<16x16xi32>
      %19 = tpu.iota {dimensions = array<i32: 1>} : vector<16x16xi32>
      %20 = arith.addi %18, %19 : vector<16x16xi32>
      %c15_i32 = arith.constant 15 : i32
      %21 = vector.broadcast %c15_i32 : i32 to vector<16x16xi32>
      %22 = arith.cmpi eq, %20, %21 : vector<16x16xi32>
      %23 = arith.extui %22 : vector<16x16xi1> to vector<16x16xi32>
      %24 = arith.sitofp %23 : vector<16x16xi32> to vector<16x16xf32>
      %c0_6 = arith.constant 0 : index
      %c0_7 = arith.constant 0 : index
      %c0_8 = arith.constant 0 : index
      %25 = vector.load %arg4[%c0_6, %c0_7, %c0_8] : memref<1x16x16xf32, #tpu.memory_space<vmem>>, vector<1x16x16xf32>
      %26 = vector.shape_cast %25 : vector<1x16x16xf32> to vector<16x16xf32>
      %cst = arith.constant dense<0.000000e+00> : vector<16x16xf32>
      %27 = tpu.matmul %24, %26, %cst {dimension_numbers = #tpu.dot_dimension_numbers<[1], [0], [0], [1], [0, 0, 1, 1], [], []>} : vector<16x16xf32>, vector<16x16xf32>, vector<16x16xf32> -> vector<16x16xf32>
      %c0_9 = arith.constant 0 : index
      %c0_10 = arith.constant 0 : index
      %c0_11 = arith.constant 0 : index
      %28 = vector.load %arg5[%c0_9, %c0_10, %c0_11] : memref<1x16x16xf32, #tpu.memory_space<vmem>>, vector<1x16x16xf32>
      %29 = vector.shape_cast %28 : vector<1x16x16xf32> to vector<16x16xf32>
      %30 = vector.shape_cast %27 : vector<16x16xf32> to vector<1x16x16xf32>
      tpu.vector_store %arg5[%c0_9, %c0_10, %c0_11], %30 {strides = array<i32>} : memref<1x16x16xf32, #tpu.memory_space<vmem>>, vector<1x16x16xf32>,
    } else {
    }
    %12 = arith.andi %1, %5 : i1
    %13 = arith.extui %12 : i1 to i32
    %c0_i32_4 = arith.constant 0 : i32
    %14 = arith.cmpi ne, %13, %c0_i32_4 : i32
    scf.if %14 {
      %18 = tpu.iota {dimensions = array<i32: 0>} : vector<16x16xi32>
      %19 = tpu.iota {dimensions = array<i32: 1>} : vector<16x16xi32>
      %20 = arith.addi %18, %19 : vector<16x16xi32>
      %c15_i32 = arith.constant 15 : i32
      %21 = vector.broadcast %c15_i32 : i32 to vector<16x16xi32>
      %22 = arith.cmpi eq, %20, %21 : vector<16x16xi32>
      %23 = arith.extui %22 : vector<16x16xi1> to vector<16x16xi32>
      %24 = arith.sitofp %23 : vector<16x16xi32> to vector<16x16xf32>
      %c0_6 = arith.constant 0 : index
      %c0_7 = arith.constant 0 : index
      %c0_8 = arith.constant 0 : index
      %25 = vector.load %arg4[%c0_6, %c0_7, %c0_8] : memref<1x16x16xf32, #tpu.memory_space<vmem>>, vector<1x16x16xf32>
      %26 = vector.shape_cast %25 : vector<1x16x16xf32> to vector<16x16xf32>
      %cst = arith.constant dense<0.000000e+00> : vector<16x16xf32>
      %27 = tpu.matmul %26, %24, %cst {dimension_numbers = #tpu.dot_dimension_numbers<[1], [0], [0], [1], [0, 0, 1, 1], [], []>} : vector<16x16xf32>, vector<16x16xf32>, vector<16x16xf32> -> vector<16x16xf32>
      %c0_9 = arith.constant 0 : index
      %c0_10 = arith.constant 0 : index
      %c0_11 = arith.constant 0 : index
      %28 = vector.load %arg5[%c0_9, %c0_10, %c0_11] : memref<1x16x16xf32, #tpu.memory_space<vmem>>, vector<1x16x16xf32>
      %29 = vector.shape_cast %28 : vector<1x16x16xf32> to vector<16x16xf32>
      %30 = vector.shape_cast %27 : vector<16x16xf32> to vector<1x16x16xf32>
      tpu.vector_store %arg5[%c0_9, %c0_10, %c0_11], %30 {strides = array<i32>} : memref<1x16x16xf32, #tpu.memory_space<vmem>>, vector<1x16x16xf32>,
    } else {
    }
    %15 = arith.andi %1, %3 : i1
    %16 = arith.extui %15 : i1 to i32
    %c0_i32_5 = arith.constant 0 : i32
    %17 = arith.cmpi ne, %16, %c0_i32_5 : i32
    scf.if %17 {
      %18 = tpu.iota {dimensions = array<i32: 0>} : vector<16x16xi32>
      %19 = tpu.iota {dimensions = array<i32: 1>} : vector<16x16xi32>
      %20 = arith.addi %18, %19 : vector<16x16xi32>
      %c15_i32 = arith.constant 15 : i32
      %21 = vector.broadcast %c15_i32 : i32 to vector<16x16xi32>
      %22 = arith.cmpi eq, %20, %21 : vector<16x16xi32>
      %23 = arith.extui %22 : vector<16x16xi1> to vector<16x16xi32>
      %24 = arith.sitofp %23 : vector<16x16xi32> to vector<16x16xf32>
      %25 = tpu.iota {dimensions = array<i32: 0>} : vector<16x16xi32>
      %26 = tpu.iota {dimensions = array<i32: 1>} : vector<16x16xi32>
      %27 = arith.addi %25, %26 : vector<16x16xi32>
      %c15_i32_6 = arith.constant 15 : i32
      %28 = vector.broadcast %c15_i32_6 : i32 to vector<16x16xi32>
      %29 = arith.cmpi eq, %27, %28 : vector<16x16xi32>
      %30 = arith.extui %29 : vector<16x16xi1> to vector<16x16xi32>
      %31 = arith.sitofp %30 : vector<16x16xi32> to vector<16x16xf32>
      %c0_7 = arith.constant 0 : index
      %c0_8 = arith.constant 0 : index
      %c0_9 = arith.constant 0 : index
      %32 = vector.load %arg4[%c0_7, %c0_8, %c0_9] : memref<1x16x16xf32, #tpu.memory_space<vmem>>, vector<1x16x16xf32>
      %33 = vector.shape_cast %32 : vector<1x16x16xf32> to vector<16x16xf32>
      %cst = arith.constant dense<0.000000e+00> : vector<16x16xf32>
      %34 = tpu.matmul %24, %33, %cst {dimension_numbers = #tpu.dot_dimension_numbers<[1], [0], [0], [1], [0, 0, 1, 1], [], []>} : vector<16x16xf32>, vector<16x16xf32>, vector<16x16xf32> -> vector<16x16xf32>
      %cst_10 = arith.constant dense<0.000000e+00> : vector<16x16xf32>
      %35 = tpu.matmul %34, %31, %cst_10 {dimension_numbers = #tpu.dot_dimension_numbers<[1], [0], [0], [1], [0, 0, 1, 1], [], []>} : vector<16x16xf32>, vector<16x16xf32>, vector<16x16xf32> -> vector<16x16xf32>
      %c0_11 = arith.constant 0 : index
      %c0_12 = arith.constant 0 : index
      %c0_13 = arith.constant 0 : index
      %36 = vector.load %arg5[%c0_11, %c0_12, %c0_13] : memref<1x16x16xf32, #tpu.memory_space<vmem>>, vector<1x16x16xf32>
      %37 = vector.shape_cast %36 : vector<1x16x16xf32> to vector<16x16xf32>
      %38 = vector.shape_cast %35 : vector<16x16xf32> to vector<1x16x16xf32>
      tpu.vector_store %arg5[%c0_11, %c0_12, %c0_13], %38 {strides = array<i32>} : memref<1x16x16xf32, #tpu.memory_space<vmem>>, vector<1x16x16xf32>,
    } else {
    }
    return
  }
  func.func @transform_0(%arg0: i32, %arg1: i32, %arg2: i32, %arg3: memref<2xi32, #tpu.memory_space<smem>>) -> (i32, i32, i32) {
    %c0 = arith.constant 0 : index
    %0 = memref.load %arg3[%c0] : memref<2xi32, #tpu.memory_space<smem>>
    %c1 = arith.constant 1 : index
    %1 = memref.load %arg3[%c1] : memref<2xi32, #tpu.memory_space<smem>>
    %c2_i32 = arith.constant 2 : i32
    %2 = arith.muli %c2_i32, %arg1 : i32
    %c0_i32 = arith.constant 0 : i32
    %3 = arith.subi %c0_i32, %2 : i32
    %4 = arith.muli %1, %3 : i32
    %5 = arith.addi %arg1, %4 : i32
    %c2_i32_0 = arith.constant 2 : i32
    %6 = arith.muli %c2_i32_0, %arg2 : i32
    %c0_i32_1 = arith.constant 0 : i32
    %7 = arith.subi %c0_i32_1, %6 : i32
    %8 = arith.muli %0, %7 : i32
    %9 = arith.addi %arg2, %8 : i32
    %c0_i32_2 = arith.constant 0 : i32
    return %arg0, %5, %9 : i32, i32, i32
  }
  func.func @transform_1(%arg0: i32, %arg1: i32, %arg2: i32, %arg3: memref<2xi32, #tpu.memory_space<smem>>) -> (i32, i32, i32) {
    %c0_i32 = arith.constant 0 : i32
    return %arg0, %arg1, %arg2 : i32, i32, i32
  }
}

</mosaic_0001>

<llo_original>
// kernel: tpu_custom_call.1
$region0: #{tpu_custom_call.1}
  #allocation0 [shape = 'u32[]', space=smem, size = 0x4, offset = 0x4, fixed_abs, tag = 'smem constant byte address 0x4 - core index']
  #allocation1 [shape = 'u32[144,128]{1,0:T(1,128)}', space=vmem, size = 0x12000, scoped, tag = 'internal scratch']
  #allocation2 [shape = 's32[1]{0}', space=sflag, size = 0x4, scoped, tag = 'scoped memory for tpu_custom_call.1']
  #allocation3 [shape = 'u8[512]{0}', space=smem, size = 0x200, scoped, tag = 'prefetched SMEM operand 0']
  %s0 = inlined_call_operand.hbm [shape: s32[2], index: 0, kind: input, shape index: {}]
  %s1 = inlined_call_operand.hbm [shape: f32[4,16,16], index: 1, kind: input, shape index: {}]
  %s2 = inlined_call_operand.hbm [shape: f32[4,16,16], index: 2, kind: output, shape index: {}]
  %s3 = sld [smem:[#allocation0]]
  $region57: #{tpu_custom_call.1} parent=0
    _
  %s5 = ssub.s32 1, %s3
  %s6 = scalar_select 0, %s5, %s3
  %8 = dma.hbm_to_smem %s0, 16, [#allocation3], [#allocation2]
  %9 = dma.done [#allocation2], 16
  %10 = sfence
  $region1: #{tpu_custom_call.1} parent=0
    #allocation4 [shape = 'u8[16384]{0}', space=vmem, size = 0x4000, scoped, tag = 'input window, operand 1']
    #allocation5 [shape = 's32[2]{0}', space=sflag, size = 0x8, scoped, tag = 'scoped memory for tpu_custom_call.1']
    #allocation6 [shape = 's32[2]{0}', space=sflag, size = 0x8, scoped, tag = 'scoped memory for tpu_custom_call.1']
    #allocation7 [shape = 'u8[16384]{0}', space=vmem, size = 0x4000, scoped, tag = 'output window, operand 0']
    %11 = vsyncpa [#allocation5], 0
    %s12 = scalar_lea.sflag [#allocation5], 1
    %13 = vsyncpa %s12, 0
    %14 = vsyncpa [#allocation6], 0
    %s15 = scalar_lea.sflag [#allocation6], 1
    %16 = vsyncpa %s15, 0
    loop: start=0, step=1, limit=6
    $region2: #{tpu_custom_call.1} parent=1 // loop_pre_header
      _
    $region3: #{tpu_custom_call.1} parent=1 // loop_header
      %s18 = sphi 0, %s22
      %p19 = scmp.ge.s32.totalorder %s18, 6
      %s25 = sphi 0, %s44
      %s26 = sphi 0, %s40
      %s27 = sphi 0, %s36
      %s28 = sphi 0, %s25
      %s29 = sphi 0, %s26
      %s30 = sphi 0, %s27
      %s31 = sphi 0, %s28
      %s32 = sphi 0, %s29
      %s33 = sphi 0, %s30
      %s71 = sphi 0, %s73
      %s74 = sphi 0, %s71
      %s75 = sphi 0, %s74
      %s91 = sphi 0, %s75
      %s101 = sphi 0, %s103
      %s104 = sphi 0, %s101
      %s105 = sphi 0, %s104
      %s121 = sphi 0, %s105
    $region4: #{tpu_custom_call.1} parent=1 // loop_header_branch
      %21 = sbr.rel (%p19) target = $region8
    $region5: #{tpu_custom_call.1} parent=1 // loop_body
      %s23 = ssub.s32 %s18, 1
      %s24 = ssub.s32 %s18, 2
      %s34 = sadd.s32 1, %s27
      %p35 = scmp.ge.s32.totalorder %s34, 1
      %s36 = scalar_select %p35, 0, %s34
      %s37 = sadd.s32 1, %s26
      %s38 = scalar_select %p35, %s37, %s26
      %p39 = scmp.ge.s32.totalorder %s38, 1
      %s40 = scalar_select %p39, 0, %s38
      %s41 = sadd.s32 1, %s25
      %s42 = scalar_select %p39, %s41, %s25
      %p43 = scmp.ge.s32.totalorder %s42, 4
      %s44 = scalar_select %p43, 0, %s42
      %s45 = sld [smem:[#allocation3]]
      %s46 = sld [smem:[#allocation3 + $0x1]]
      %s47 = smul.u32 %s26, 2
      %s48 = ssub.s32 0, %s47
      %s49 = smul.u32 %s46, %s48
      %s50 = sadd.s32 %s26, %s49
      %s51 = smul.u32 %s27, 2
      %s52 = ssub.s32 0, %s51
      %s53 = smul.u32 %s45, %s52
      %s54 = sadd.s32 %s27, %s53
      %s55 = sld [smem:[#allocation3]]
      %s56 = sld [smem:[#allocation3 + $0x1]]
      %s57 = smul.u32 %s40, 2
      %s58 = ssub.s32 0, %s57
      %s59 = smul.u32 %s56, %s58
      %s60 = sadd.s32 %s40, %s59
      %s61 = smul.u32 %s36, 2
      %s62 = ssub.s32 0, %s61
      %s63 = smul.u32 %s55, %s62
      %s64 = sadd.s32 %s36, %s63
      %s65 = ssub.s32 %s25, %s44
      %s66 = ssub.s32 %s50, %s60
      %s67 = sor.u32 %s65, %s66
      %s68 = ssub.s32 %s54, %s64
      %s69 = sor.u32 %s67, %s68
      %p70 = scmp.eq.s32.totalorder %s69, 0
      %s72 = sadd.s32 %s71, 1
      %s73 = scalar_select %p70, %s71, %s72
      %p76 = pneg %p70
      %p77 = scmp.eq.s32.totalorder %s18, 3
      %p78 = por %p76, %p77
      %p79 = scmp.ne.s32.totalorder %s71, %s74
      %p80 = scmp.eq.s32.totalorder %s18, 0
      %p81 = por %p79, %p80
      %p82 = scmp.ne.s32.totalorder %s71, %s74
      %p83 = scmp.eq.s32.totalorder %s23, 3
      %p84 = por %p82, %p83
      %p85 = scmp.ne.s32.totalorder %s74, %s75
      %p86 = scmp.eq.s32.totalorder %s23, 0
      %p87 = por %p85, %p86
      %p88 = scmp.ne.s32.totalorder %s74, %s75
      %p89 = scmp.eq.s32.totalorder %s24, 3
      %p90 = por %p88, %p89
      %p92 = scmp.ne.s32.totalorder %s75, %s91
      %p93 = scmp.eq.s32.totalorder %s24, 0
      %p94 = por %p92, %p93
      %s95 = ssub.s32 %s25, %s44
      %s96 = ssub.s32 %s26, %s40
      %s97 = sor.u32 %s95, %s96
      %s98 = ssub.s32 %s27, %s36
      %s99 = sor.u32 %s97, %s98
      %p100 = scmp.eq.s32.totalorder %s99, 0
      %s102 = sadd.s32 %s101, 1
      %s103 = scalar_select %p100, %s101, %s102
      %p106 = pneg %p100
      %p107 = scmp.eq.s32.totalorder %s18, 3
      %p108 = por %p106, %p107
      %p109 = scmp.ne.s32.totalorder %s101, %s104
      %p110 = scmp.eq.s32.totalorder %s18, 0
      %p111 = por %p109, %p110
      %p112 = scmp.ne.s32.totalorder %s101, %s104
      %p113 = scmp.eq.s32.totalorder %s23, 3
      %p114 = por %p112, %p113
      %p115 = scmp.ne.s32.totalorder %s104, %s105
      %p116 = scmp.eq.s32.totalorder %s23, 0
      %p117 = por %p115, %p116
      %p118 = scmp.ne.s32.totalorder %s104, %s105
      %p119 = scmp.eq.s32.totalorder %s24, 3
      %p120 = por %p118, %p119
      %p122 = scmp.ne.s32.totalorder %s105, %s121
      %p123 = scmp.eq.s32.totalorder %s24, 0
      %p124 = por %p122, %p123
      %p125 = scmp.le.s32.totalorder 1, %s18
      %p126 = scmp.lt.s32.totalorder %s18, 5
      %p127 = pnand %p125, %p126
      %p128 = pneg %p127
      // Predicated region
      $region9: #{tpu_custom_call.1} parent=5 // pred_check
        _
      $region10: #{tpu_custom_call.1} parent=5 // pred_check_branch
        %130 = sbr.rel (%p127) target = $region12
      $region11: #{tpu_custom_call.1} parent=5 // pred_region
        %s131 = ssub.s32 %s18, 1
      $region12: #{tpu_custom_call.1} parent=5 // pred_fallthru
        _
      %p132 = scmp.lt.s32.totalorder %s18, 4
      // Predicated region
      $region13: #{tpu_custom_call.1} parent=5 // pred_check
        %p133 = pneg %p132
      $region14: #{tpu_custom_call.1} parent=5 // pred_check_branch
        %135 = sbr.rel (%p133) target = $region16
      $region15: #{tpu_custom_call.1} parent=5 // pred_region
        // Predicated region
        $region17: #{tpu_custom_call.1} parent=15 // pred_check
          %p136 = pneg %p81
        $region18: #{tpu_custom_call.1} parent=15 // pred_check_branch
          %138 = sbr.rel (%p136) target = $region20
        $region19: #{tpu_custom_call.1} parent=15 // pred_region
          %s139 = sand.u32 %s71, 1
          %s140 = scalar_lea.sflag [#allocation5], %s139
          %s141 = sand.u32 %s71, 1
          %s142 = smul.addr %s141, 16
          %s143 = scalar_lea.vmem [#allocation4], %s142
          %s144 = sld [smem:[#allocation3]]
          %s145 = sld [smem:[#allocation3 + $0x1]]
          %s146 = smul.u32 %s26, 2
          %s147 = ssub.s32 0, %s146
          %s148 = smul.u32 %s145, %s147
          %s149 = sadd.s32 %s26, %s148
          %s150 = smul.u32 %s27, 2
          %s151 = ssub.s32 0, %s150
          %s152 = smul.u32 %s144, %s151
          %s153 = sadd.s32 %s27, %s152
          %s154 = smul.u32 2, %s149
          %s156 = ssub.s32 256, 256
          %157 = vsyncadd %s140, %s156
          %s158 = sadd.s32 %s153, %s154
          %s159 = smul.addr %s25, 2
          %s160 = sadd.s32 %s158, %s159
          %s161 = smul.addr %s160, 128
          %s162 = scalar_lea.hbm %s1, %s161
          %s163 = sshll.u32 %s143, 4
          %s164 = int_to_ptr.vmem [resolvable:$true] %s163
          %169 = dma.hbm_to_vmem [thread:$0]  %s162, 256, %s164, %s140, 128, 128, 8
        $region20: #{tpu_custom_call.1} parent=15 // pred_fallthru
          _
      $region16: #{tpu_custom_call.1} parent=5 // pred_fallthru
        _
      %p170 = scmp.le.s32.totalorder 1, %s18
      %p171 = scmp.lt.s32.totalorder %s18, 5
      %p172 = pnand %p170, %p171
      %p173 = pneg %p172
      // Predicated region
      $region21: #{tpu_custom_call.1} parent=5 // pred_check
        _
      $region22: #{tpu_custom_call.1} parent=5 // pred_check_branch
        %175 = sbr.rel (%p172) target = $region24
      $region23: #{tpu_custom_call.1} parent=5 // pred_region
        %s176 = ssub.s32 %s18, 1
        %s177 = sand.u32 %s74, 1
        %s178 = scalar_lea.sflag [#allocation5], %s177
        %s179 = sand.u32 %s74, 1
        %s180 = smul.addr %s179, 16
        %s181 = scalar_lea.vmem [#allocation4], %s180
        // Predicated region
        $region25: #{tpu_custom_call.1} parent=23 // pred_check
          %p182 = pneg %p87
        $region26: #{tpu_custom_call.1} parent=23 // pred_check_branch
          %184 = sbr.rel (%p182) target = $region28
        $region27: #{tpu_custom_call.1} parent=23 // pred_region
          %185 = dma.done %s178, 256
        $region28: #{tpu_custom_call.1} parent=23 // pred_fallthru
          _
        %s186 = sand.u32 %s74, 1
        %s187 = scalar_lea.sflag [#allocation5], %s186
        %s188 = sand.u32 %s74, 1
        %s189 = smul.addr %s188, 16
        %s190 = scalar_lea.vmem [#allocation4], %s189
        %p191 = pneg %p87
        %p192 = pneg %p84
        %p193 = pneg %p117
        %p194 = pneg %p114
        %s195 = sand.u32 %s104, 1
        %s196 = scalar_lea.sflag [#allocation6], %s195
        %s197 = sand.u32 %s104, 1
        %s198 = smul.addr %s197, 16
        %s199 = scalar_lea.vmem [#allocation7], %s198
        %s200 = sld [smem:[#allocation3]]
        %s201 = sld [smem:[#allocation3 + $0x1]]
        %s202 = smul.u32 %s29, 2
        %s203 = ssub.s32 0, %s202
        %s204 = smul.u32 %s201, %s203
        %s205 = sadd.s32 %s29, %s204
        %s206 = smul.u32 %s30, 2
        %s207 = ssub.s32 0, %s206
        %s208 = smul.u32 %s200, %s207
        %s209 = sadd.s32 %s30, %s208
        %s210 = smul.u32 2, %s205
        %s211 = smul.u32 2, %s29
        %s212 = sld [smem:[#allocation3]]
        %p213 = scmp.gt.s32.totalorder %s212, 0
        %s214 = sld [smem:[#allocation3 + $0x1]]
        %p215 = scmp.gt.s32.totalorder %s214, 0
        %p216 = scmp.le.s32.totalorder %s212, 0
        %p217 = scmp.le.s32.totalorder %s214, 0
        %p218 = pnand %p216, %p217
        %p219 = pneg %p218
        // Predicated region
        $region29: #{tpu_custom_call.1} parent=23 // pred_check
          _
        $region30: #{tpu_custom_call.1} parent=23 // pred_check_branch
          %221 = sbr.rel (%p218) target = $region32
        $region31: #{tpu_custom_call.1} parent=23 // pred_region
          %v222 = vld [vmem:[%s181] sm:$0xff]
          %v223 = vld [vmem:[%s181 + $0x8] sm:$0xff]
          %vm224 = vcmask 130048
          %225 = vst.msk [vmem:[%s199] sm:$0xff] %vm224, %v222
          %226 = vst.msk [vmem:[%s199 + $0x8] sm:$0xff] %vm224, %v223
        $region32: #{tpu_custom_call.1} parent=23 // pred_fallthru
          _
        %p227 = pnand %p215, %p216
        %p228 = pneg %p227
        // Predicated region
        $region33: #{tpu_custom_call.1} parent=23 // pred_check
          _
        $region34: #{tpu_custom_call.1} parent=23 // pred_check_branch
          %230 = sbr.rel (%p227) target = $region36
        $region35: #{tpu_custom_call.1} parent=23 // pred_region
          %v231 = vlaneseq
          %v232 = vshrl.u32 %v231, 7
          %v233 = vadd.s32 %v232, 8
          %v234 = vlaneseq
          %v235 = vand.u32 %v234, 127
          %v236 = vadd.s32 %v232, %v235
          %v237 = vadd.s32 %v233, %v235
          %vm238 = vcmp.eq.s32.totalorder %v236, 15
          %vm239 = vcmp.eq.s32.totalorder %v237, 15
          %v240 = vsel %vm238, 1, 0
          %v241 = vsel %vm239, 1, 0
          %v242 = vcvt.s32.f32 %v240
          %v243 = vcvt.s32.f32 %v241
          %v244 = vld [vmem:[%s181] sm:$0xff]
          %v245 = vld [vmem:[%s181 + $0x8] sm:$0xff]
          %vm246 = vcmask 130048
          %v248 = vsel %vm246, %v242, 0
          %v251 = vsel %vm246, %v243, 0
          %253 = vmatprep.subr.mxu0 0.0
          %254 = vmatpush1.msra.mxu0 %v244
          %255 = vmatprep.subr.mxu0 0.0
          %256 = vmatpush1.msra.mxu0 %v245
          %257 = vmatprep.subr.mxu0 0.0
          %258 = vmatpush1.msra.mxu0 0.0
          %259 = vmatprep.subr.mxu0 0.0
          %260 = vmatpush1.msra.mxu0 0.0
          %261 = vmatprep.subr.mxu0 0.0
          %262 = vmatpush1.msra.mxu0 0.0
          %263 = vmatprep.subr.mxu0 0.0
          %264 = vmatpush1.msra.mxu0 0.0
          %265 = vmatprep.subr.mxu0 0.0
          %266 = vmatpush1.msra.mxu0 0.0
          %267 = vmatprep.subr.mxu0 0.0
          %268 = vmatpush1.msra.mxu0 0.0
          %269 = vmatprep.subr.mxu0 0.0
          %270 = vmatpush1.msra.mxu0 0.0
          %271 = vmatprep.subr.mxu0 0.0
          %272 = vmatpush1.msra.mxu0 0.0
          %273 = vmatprep.subr.mxu0 0.0
          %274 = vmatpush1.msra.mxu0 0.0
          %275 = vmatprep.subr.mxu0 0.0
          %276 = vmatpush1.msra.mxu0 0.0
          %277 = vmatprep.subr.mxu0 0.0
          %278 = vmatpush1.msra.mxu0 0.0
          %279 = vmatprep.subr.mxu0 0.0
          %280 = vmatpush1.msra.mxu0 0.0
          %281 = vmatprep.subr.mxu0 0.0
          %282 = vmatpush1.msra.mxu0 0.0
          %283 = vmatprep.subr.mxu0 0.0
          %284 = vmatpush1.msra.mxu0 0.0
          %285 = vmatprep.subr.mxu0 0.0
          %286 = vmatpush1.msra.mxu0 0.0
          %287 = vmatprep.subr.mxu0 0.0
          %288 = vmatpush1.msra.mxu0 0.0
          %289 = vmatprep.subr.mxu0 0.0
          %290 = vmatpush1.msra.mxu0 0.0
          %291 = vmatprep.subr.mxu0 0.0
          %292 = vmatpush1.msra.mxu0 0.0
          %293 = vmatprep.subr.mxu0 0.0
          %294 = vmatpush1.msra.mxu0 0.0
          %295 = vmatprep.subr.mxu0 0.0
          %296 = vmatpush1.msra.mxu0 0.0
          %297 = vmatprep.subr.mxu0 0.0
          %298 = vmatpush1.msra.mxu0 0.0
          %299 = vmatprep.subr.mxu0 0.0
          %300 = vmatpush1.msra.mxu0 0.0
          %301 = vmatprep.subr.mxu0 0.0
          %302 = vmatpush1.msra.mxu0 0.0
          %303 = vmatprep.subr.mxu0 0.0
          %304 = vmatpush1.msra.mxu0 0.0
          %305 = vmatprep.subr.mxu0 0.0
          %306 = vmatpush1.msra.mxu0 0.0
          %307 = vmatprep.subr.mxu0 0.0
          %308 = vmatpush1.msra.mxu0 0.0
          %309 = vmatprep.subr.mxu0 0.0
          %310 = vmatpush1.msra.mxu0 0.0
          %311 = vmatprep.subr.mxu0 0.0
          %312 = vmatpush1.msra.mxu0 0.0
          %313 = vmatprep.subr.mxu0 0.0
          %314 = vmatpush1.msra.mxu0 0.0
          %315 = vmatprep.subr.mxu0 0.0
          %316 = vmatpush1.msra.mxu0 0.0
          %317 = vmatprep.mubr.f32.mxu0 0.0
          %318 = vmatmul.mubr.f32.gmra.mrb[0].mxu0 %v248
          %v319 = vpop.f32.mrb[0].mxu0
          %v320 = vadd.f32 0.0, %v319
          %v321 = vpop.f32.mrb[0].mxu0
          %322 = vmatprep.mubr.f32.mxu0 0.0
          %323 = vmatmul.mubr.f32.gmra.mrb[0].mxu0 %v251
          %v324 = vpop.f32.mrb[0].mxu0
          %v325 = vadd.f32 0.0, %v324
          %v326 = vpop.f32.mrb[0].mxu0
          %327 = vdwg.mxu0
          %328 = vst.msk [vmem:[%s199] sm:$0xff] %vm246, %v320
          %329 = vst.msk [vmem:[%s199 + $0x8] sm:$0xff] %vm246, %v325
        $region36: #{tpu_custom_call.1} parent=23 // pred_fallthru
          _
        %p330 = pnand %p213, %p217
        %p331 = pneg %p330
        // Predicated region
        $region37: #{tpu_custom_call.1} parent=23 // pred_check
          _
        $region38: #{tpu_custom_call.1} parent=23 // pred_check_branch
          %333 = sbr.rel (%p330) target = $region40
        $region39: #{tpu_custom_call.1} parent=23 // pred_region
          %v334 = vlaneseq
          %v335 = vshrl.u32 %v334, 7
          %v336 = vadd.s32 %v335, 8
          %v337 = vlaneseq
          %v338 = vand.u32 %v337, 127
          %v339 = vadd.s32 %v335, %v338
          %v340 = vadd.s32 %v336, %v338
          %vm341 = vcmp.eq.s32.totalorder %v339, 15
          %vm342 = vcmp.eq.s32.totalorder %v340, 15
          %v343 = vsel %vm341, 1, 0
          %v344 = vsel %vm342, 1, 0
          %v345 = vcvt.s32.f32 %v343
          %v346 = vcvt.s32.f32 %v344
          %v347 = vld [vmem:[%s181] sm:$0xff]
          %v348 = vld [vmem:[%s181 + $0x8] sm:$0xff]
          %vm349 = vcmask 130048
          %v351 = vsel %vm349, %v347, 0
          %v354 = vsel %vm349, %v348, 0
          %356 = vmatprep.subr.mxu0 0.0
          %357 = vmatpush1.msra.mxu0 %v345
          %358 = vmatprep.subr.mxu0 0.0
          %359 = vmatpush1.msra.mxu0 %v346
          %360 = vmatprep.subr.mxu0 0.0
          %361 = vmatpush1.msra.mxu0 0.0
          %362 = vmatprep.subr.mxu0 0.0
          %363 = vmatpush1.msra.mxu0 0.0
          %364 = vmatprep.subr.mxu0 0.0
          %365 = vmatpush1.msra.mxu0 0.0
          %366 = vmatprep.subr.mxu0 0.0
          %367 = vmatpush1.msra.mxu0 0.0
          %368 = vmatprep.subr.mxu0 0.0
          %369 = vmatpush1.msra.mxu0 0.0
          %370 = vmatprep.subr.mxu0 0.0
          %371 = vmatpush1.msra.mxu0 0.0
          %372 = vmatprep.subr.mxu0 0.0
          %373 = vmatpush1.msra.mxu0 0.0
          %374 = vmatprep.subr.mxu0 0.0
          %375 = vmatpush1.msra.mxu0 0.0
          %376 = vmatprep.subr.mxu0 0.0
          %377 = vmatpush1.msra.mxu0 0.0
          %378 = vmatprep.subr.mxu0 0.0
          %379 = vmatpush1.msra.mxu0 0.0
          %380 = vmatprep.subr.mxu0 0.0
          %381 = vmatpush1.msra.mxu0 0.0
          %382 = vmatprep.subr.mxu0 0.0
          %383 = vmatpush1.msra.mxu0 0.0
          %384 = vmatprep.subr.mxu0 0.0
          %385 = vmatpush1.msra.mxu0 0.0
          %386 = vmatprep.subr.mxu0 0.0
          %387 = vmatpush1.msra.mxu0 0.0
          %388 = vmatprep.subr.mxu0 0.0
          %389 = vmatpush1.msra.mxu0 0.0
          %390 = vmatprep.subr.mxu0 0.0
          %391 = vmatpush1.msra.mxu0 0.0
          %392 = vmatprep.subr.mxu0 0.0
          %393 = vmatpush1.msra.mxu0 0.0
          %394 = vmatprep.subr.mxu0 0.0
          %395 = vmatpush1.msra.mxu0 0.0
          %396 = vmatprep.subr.mxu0 0.0
          %397 = vmatpush1.msra.mxu0 0.0
          %398 = vmatprep.subr.mxu0 0.0
          %399 = vmatpush1.msra.mxu0 0.0
          %400 = vmatprep.subr.mxu0 0.0
          %401 = vmatpush1.msra.mxu0 0.0
          %402 = vmatprep.subr.mxu0 0.0
          %403 = vmatpush1.msra.mxu0 0.0
          %404 = vmatprep.subr.mxu0 0.0
          %405 = vmatpush1.msra.mxu0 0.0
          %406 = vmatprep.subr.mxu0 0.0
          %407 = vmatpush1.msra.mxu0 0.0
          %408 = vmatprep.subr.mxu0 0.0
          %409 = vmatpush1.msra.mxu0 0.0
          %410 = vmatprep.subr.mxu0 0.0
          %411 = vmatpush1.msra.mxu0 0.0
          %412 = vmatprep.subr.mxu0 0.0
          %413 = vmatpush1.msra.mxu0 0.0
          %414 = vmatprep.subr.mxu0 0.0
          %415 = vmatpush1.msra.mxu0 0.0
          %416 = vmatprep.subr.mxu0 0.0
          %417 = vmatpush1.msra.mxu0 0.0
          %418 = vmatprep.subr.mxu0 0.0
          %419 = vmatpush1.msra.mxu0 0.0
          %420 = vmatprep.mubr.f32.mxu0 0.0
          %421 = vmatmul.mubr.f32.gmra.mrb[0].mxu0 %v351
          %v422 = vpop.f32.mrb[0].mxu0
          %v423 = vadd.f32 0.0, %v422
          %v424 = vpop.f32.mrb[0].mxu0
          %425 = vmatprep.mubr.f32.mxu0 0.0
          %426 = vmatmul.mubr.f32.gmra.mrb[0].mxu0 %v354
          %v427 = vpop.f32.mrb[0].mxu0
          %v428 = vadd.f32 0.0, %v427
          %v429 = vpop.f32.mrb[0].mxu0
          %430 = vdwg.mxu0
          %431 = vst.msk [vmem:[%s199] sm:$0xff] %vm349, %v423
          %432 = vst.msk [vmem:[%s199 + $0x8] sm:$0xff] %vm349, %v428
        $region40: #{tpu_custom_call.1} parent=23 // pred_fallthru
          _
        %p433 = pnand %p213, %p215
        %p434 = pneg %p433
        // Predicated region
        $region41: #{tpu_custom_call.1} parent=23 // pred_check
          _
        $region42: #{tpu_custom_call.1} parent=23 // pred_check_branch
          %436 = sbr.rel (%p433) target = $region44
        $region43: #{tpu_custom_call.1} parent=23 // pred_region
          %v437 = vlaneseq
          %v438 = vshrl.u32 %v437, 7
          %v439 = vadd.s32 %v438, 8
          %v440 = vlaneseq
          %v441 = vand.u32 %v440, 127
          %v442 = vadd.s32 %v438, %v441
          %v443 = vadd.s32 %v439, %v441
          %vm444 = vcmp.eq.s32.totalorder %v442, 15
          %vm445 = vcmp.eq.s32.totalorder %v443, 15
          %v446 = vsel %vm444, 1, 0
          %v447 = vsel %vm445, 1, 0
          %v448 = vcvt.s32.f32 %v446
          %v449 = vcvt.s32.f32 %v447
          %v450 = vld [vmem:[%s181] sm:$0xff]
          %v451 = vld [vmem:[%s181 + $0x8] sm:$0xff]
          %vm452 = vcmask 130048
          %v454 = vsel %vm452, %v448, 0
          %v457 = vsel %vm452, %v449, 0
          %459 = vmatprep.subr.mxu0 0.0
          %460 = vmatpush1.msra.mxu0 %v450
          %461 = vmatprep.subr.mxu0 0.0
          %462 = vmatpush1.msra.mxu0 %v451
          %463 = vmatprep.subr.mxu0 0.0
          %464 = vmatpush1.msra.mxu0 0.0
          %465 = vmatprep.subr.mxu0 0.0
          %466 = vmatpush1.msra.mxu0 0.0
          %467 = vmatprep.subr.mxu0 0.0
          %468 = vmatpush1.msra.mxu0 0.0
          %469 = vmatprep.subr.mxu0 0.0
          %470 = vmatpush1.msra.mxu0 0.0
          %471 = vmatprep.subr.mxu0 0.0
          %472 = vmatpush1.msra.mxu0 0.0
          %473 = vmatprep.subr.mxu0 0.0
          %474 = vmatpush1.msra.mxu0 0.0
          %475 = vmatprep.subr.mxu0 0.0
          %476 = vmatpush1.msra.mxu0 0.0
          %477 = vmatprep.subr.mxu0 0.0
          %478 = vmatpush1.msra.mxu0 0.0
          %479 = vmatprep.subr.mxu0 0.0
          %480 = vmatpush1.msra.mxu0 0.0
          %481 = vmatprep.subr.mxu0 0.0
          %482 = vmatpush1.msra.mxu0 0.0
          %483 = vmatprep.subr.mxu0 0.0
          %484 = vmatpush1.msra.mxu0 0.0
          %485 = vmatprep.subr.mxu0 0.0
          %486 = vmatpush1.msra.mxu0 0.0
          %487 = vmatprep.subr.mxu0 0.0
          %488 = vmatpush1.msra.mxu0 0.0
          %489 = vmatprep.subr.mxu0 0.0
          %490 = vmatpush1.msra.mxu0 0.0
          %491 = vmatprep.subr.mxu0 0.0
          %492 = vmatpush1.msra.mxu0 0.0
          %493 = vmatprep.subr.mxu0 0.0
          %494 = vmatpush1.msra.mxu0 0.0
          %495 = vmatprep.subr.mxu0 0.0
          %496 = vmatpush1.msra.mxu0 0.0
          %497 = vmatprep.subr.mxu0 0.0
          %498 = vmatpush1.msra.mxu0 0.0
          %499 = vmatprep.subr.mxu0 0.0
          %500 = vmatpush1.msra.mxu0 0.0
          %501 = vmatprep.subr.mxu0 0.0
          %502 = vmatpush1.msra.mxu0 0.0
          %503 = vmatprep.subr.mxu0 0.0
          %504 = vmatpush1.msra.mxu0 0.0
          %505 = vmatprep.subr.mxu0 0.0
          %506 = vmatpush1.msra.mxu0 0.0
          %507 = vmatprep.subr.mxu0 0.0
          %508 = vmatpush1.msra.mxu0 0.0
          %509 = vmatprep.subr.mxu0 0.0
          %510 = vmatpush1.msra.mxu0 0.0
          %511 = vmatprep.subr.mxu0 0.0
          %512 = vmatpush1.msra.mxu0 0.0
          %513 = vmatprep.subr.mxu0 0.0
          %514 = vmatpush1.msra.mxu0 0.0
          %515 = vmatprep.subr.mxu0 0.0
          %516 = vmatpush1.msra.mxu0 0.0
          %517 = vmatprep.subr.mxu0 0.0
          %518 = vmatpush1.msra.mxu0 0.0
          %519 = vmatprep.subr.mxu0 0.0
          %520 = vmatpush1.msra.mxu0 0.0
          %521 = vmatprep.subr.mxu0 0.0
          %522 = vmatpush1.msra.mxu0 0.0
          %523 = vmatprep.mubr.f32.mxu0 0.0
          %524 = vmatmul.mubr.f32.gmra.mrb[0].mxu0 %v454
          %v525 = vpop.f32.mrb[0].mxu0
          %v526 = vadd.f32 0.0, %v525
          %v527 = vpop.f32.mrb[0].mxu0
          %528 = vmatprep.mubr.f32.mxu0 0.0
          %529 = vmatmul.mubr.f32.gmra.mrb[0].mxu0 %v457
          %v530 = vpop.f32.mrb[0].mxu0
          %v531 = vadd.f32 0.0, %v530
          %v532 = vpop.f32.mrb[0].mxu0
          %533 = vdwg.mxu0
          %v535 = vsel %vm452, %v526, 0
          %v538 = vsel %vm452, %v531, 0
          %540 = vmatprep.subr.mxu0 0.0
          %541 = vmatpush1.msra.mxu0 %v448
          %542 = vmatprep.subr.mxu0 0.0
          %543 = vmatpush1.msra.mxu0 %v449
          %544 = vmatprep.subr.mxu0 0.0
          %545 = vmatpush1.msra.mxu0 0.0
          %546 = vmatprep.subr.mxu0 0.0
          %547 = vmatpush1.msra.mxu0 0.0
          %548 = vmatprep.subr.mxu0 0.0
          %549 = vmatpush1.msra.mxu0 0.0
          %550 = vmatprep.subr.mxu0 0.0
          %551 = vmatpush1.msra.mxu0 0.0
          %552 = vmatprep.subr.mxu0 0.0
          %553 = vmatpush1.msra.mxu0 0.0
          %554 = vmatprep.subr.mxu0 0.0
          %555 = vmatpush1.msra.mxu0 0.0
          %556 = vmatprep.subr.mxu0 0.0
          %557 = vmatpush1.msra.mxu0 0.0
          %558 = vmatprep.subr.mxu0 0.0
          %559 = vmatpush1.msra.mxu0 0.0
          %560 = vmatprep.subr.mxu0 0.0
          %561 = vmatpush1.msra.mxu0 0.0
          %562 = vmatprep.subr.mxu0 0.0
          %563 = vmatpush1.msra.mxu0 0.0
          %564 = vmatprep.subr.mxu0 0.0
          %565 = vmatpush1.msra.mxu0 0.0
          %566 = vmatprep.subr.mxu0 0.0
          %567 = vmatpush1.msra.mxu0 0.0
          %568 = vmatprep.subr.mxu0 0.0
          %569 = vmatpush1.msra.mxu0 0.0
          %570 = vmatprep.subr.mxu0 0.0
          %571 = vmatpush1.msra.mxu0 0.0
          %572 = vmatprep.subr.mxu0 0.0
          %573 = vmatpush1.msra.mxu0 0.0
          %574 = vmatprep.subr.mxu0 0.0
          %575 = vmatpush1.msra.mxu0 0.0
          %576 = vmatprep.subr.mxu0 0.0
          %577 = vmatpush1.msra.mxu0 0.0
          %578 = vmatprep.subr.mxu0 0.0
          %579 = vmatpush1.msra.mxu0 0.0
          %580 = vmatprep.subr.mxu0 0.0
          %581 = vmatpush1.msra.mxu0 0.0
          %582 = vmatprep.subr.mxu0 0.0
          %583 = vmatpush1.msra.mxu0 0.0
          %584 = vmatprep.subr.mxu0 0.0
          %585 = vmatpush1.msra.mxu0 0.0
          %586 = vmatprep.subr.mxu0 0.0
          %587 = vmatpush1.msra.mxu0 0.0
          %588 = vmatprep.subr.mxu0 0.0
          %589 = vmatpush1.msra.mxu0 0.0
          %590 = vmatprep.subr.mxu0 0.0
          %591 = vmatpush1.msra.mxu0 0.0
          %592 = vmatprep.subr.mxu0 0.0
          %593 = vmatpush1.msra.mxu0 0.0
          %594 = vmatprep.subr.mxu0 0.0
          %595 = vmatpush1.msra.mxu0 0.0
          %596 = vmatprep.subr.mxu0 0.0
          %597 = vmatpush1.msra.mxu0 0.0
          %598 = vmatprep.subr.mxu0 0.0
          %599 = vmatpush1.msra.mxu0 0.0
          %600 = vmatprep.subr.mxu0 0.0
          %601 = vmatpush1.msra.mxu0 0.0
          %602 = vmatprep.subr.mxu0 0.0
          %603 = vmatpush1.msra.mxu0 0.0
          %604 = vmatprep.mubr.f32.mxu0 0.0
          %605 = vmatmul.mubr.f32.gmra.mrb[0].mxu0 %v535
          %v606 = vpop.f32.mrb[0].mxu0
          %v607 = vadd.f32 0.0, %v606
          %v608 = vpop.f32.mrb[0].mxu0
          %609 = vmatprep.mubr.f32.mxu0 0.0
          %610 = vmatmul.mubr.f32.gmra.mrb[0].mxu0 %v538
          %v611 = vpop.f32.mrb[0].mxu0
          %v612 = vadd.f32 0.0, %v611
          %v613 = vpop.f32.mrb[0].mxu0
          %614 = vdwg.mxu0
          %615 = vst.msk [vmem:[%s199] sm:$0xff] %vm452, %v607
          %616 = vst.msk [vmem:[%s199 + $0x8] sm:$0xff] %vm452, %v612
        $region44: #{tpu_custom_call.1} parent=23 // pred_fallthru
          _
        %s617 = sand.u32 %s104, 1
        %s618 = scalar_lea.sflag [#allocation6], %s617
        %s619 = sand.u32 %s104, 1
        %s620 = smul.addr %s619, 16
        %s621 = scalar_lea.vmem [#allocation7], %s620
        // Predicated region
        $region45: #{tpu_custom_call.1} parent=23 // pred_check
          %p622 = pneg %p114
        $region46: #{tpu_custom_call.1} parent=23 // pred_check_branch
          %624 = sbr.rel (%p622) target = $region48
        $region47: #{tpu_custom_call.1} parent=23 // pred_region
          %s625 = smul.u32 2, %s29
          %s627 = ssub.s32 256, 256
          %628 = vsyncadd %s618, %s627
          %s629 = sadd.s32 %s30, %s625
          %s630 = smul.addr %s28, 2
          %s631 = sadd.s32 %s629, %s630
          %s632 = smul.addr %s631, 128
          %s633 = scalar_lea.hbm %s2, %s632
          %s634 = sshll.u32 %s621, 4
          %s635 = int_to_ptr.vmem [resolvable:$true] %s634
          %640 = dma.vmem_to_hbm [thread:$0]  %s635, 256, %s633, %s618, 128, 128, 8
        $region48: #{tpu_custom_call.1} parent=23 // pred_fallthru
          _
      $region24: #{tpu_custom_call.1} parent=5 // pred_fallthru
        _
      %p641 = scmp.le.s32.totalorder 2, %s18
      // Predicated region
      $region49: #{tpu_custom_call.1} parent=5 // pred_check
        %p642 = pneg %p641
      $region50: #{tpu_custom_call.1} parent=5 // pred_check_branch
        %644 = sbr.rel (%p642) target = $region52
      $region51: #{tpu_custom_call.1} parent=5 // pred_region
        %s645 = ssub.s32 %s18, 2
        // Predicated region
        $region53: #{tpu_custom_call.1} parent=51 // pred_check
          %p646 = pneg %p120
        $region54: #{tpu_custom_call.1} parent=51 // pred_check_branch
          %648 = sbr.rel (%p646) target = $region56
        $region55: #{tpu_custom_call.1} parent=51 // pred_region
          %s649 = sand.u32 %s105, 1
          %s650 = scalar_lea.sflag [#allocation6], %s649
          %s651 = sand.u32 %s105, 1
          %s652 = smul.addr %s651, 16
          %s653 = scalar_lea.vmem [#allocation7], %s652
          %654 = dma.done %s650, 256
        $region56: #{tpu_custom_call.1} parent=51 // pred_fallthru
          _
      $region52: #{tpu_custom_call.1} parent=5 // pred_fallthru
        _
    $region6: #{tpu_custom_call.1} parent=1 // loop_footer
      %s22 = sadd.s32 1, %s18
    $region7: #{tpu_custom_call.1} parent=1 // loop_footer_branch
      %17 = sbr.rel target = $region3
    $region8: #{tpu_custom_call.1} parent=1 // loop_exit
      _
    %655 = vsyncpa [#allocation5], 1
    %s656 = scalar_lea.sflag [#allocation5], 1
    %657 = vsyncpa %s656, 1
    %658 = vsyncpa [#allocation6], 1
    %s659 = scalar_lea.sflag [#allocation6], 1
    %660 = vsyncpa %s659, 1

</llo_original>
